<compile_context>
chip_gen: v7x
topology: tpu7x:2x2x1
jax: 0.10.0
libtpu: 0.0.40
codegen_flags: <defaults>
</compile_context>

<pallas_src>
import functools

import jax
import jax.numpy as jnp
from jax.experimental import pallas as pl
from jax.experimental.pallas import tpu as pltpu


def _round_up(a, b):
    return (a + b - 1) // b * b


def _tpu_vmem_and_cores():
    """Best-effort query of per-TensorCore VMEM capacity and core count."""
    vmem_cap = 64 << 20          # conservative default (v7x per-TC VMEM)
    num_tc = 1
    try:
        info = pltpu.get_tpu_info()
        cap = getattr(info, "vmem_capacity_bytes", None)
        if isinstance(cap, int) and cap > 0:
            vmem_cap = cap
        for name in ("num_cores", "core_count", "num_tensorcores",
                     "tensorcores_per_chip"):
            v = getattr(info, name, None)
            if isinstance(v, int) and v > 0:
                num_tc = v
                break
    except Exception:
        pass
    return vmem_cap, num_tc


def _tile_vmem_bytes(tm, tk, h):
    """Rough VMEM footprint of one (TM, TK) tiling choice."""
    x_in   = 2 * tm * h * 4          # f32 x tile, double-buffered
    out    = 2 * tm * h * 4          # f32 out tile (accumulator), double-buffered
    x_bf   = tm * h * 2              # bf16 scratch copy of x
    w1     = 2 * h * tk * 2          # bf16 W1 chunk, double-buffered
    w2     = 2 * tk * h * 2          # bf16 W2 chunk, double-buffered
    interm = tm * tk * 6             # Linear1 activations (f32 + bf16 temp)
    misc   = 2 * (tk + 3 * h) * 4    # biases / LN params
    return x_in + out + x_bf + w1 + w2 + interm + misc


def _choose_tiles(n, h, f, budget, prefer_tm, prefer_tk, num_tc):
    """Pick (TM, TK): maximize TM (weight reuse), shrink TK first to fit VMEM."""
    # TK must be a multiple of 128 (lane constraint) and divide F, or equal F.
    tk_cands = [d for d in range(128, min(f, prefer_tk) + 1, 128) if f % d == 0]
    tk_cands.sort(reverse=True)
    if not tk_cands:
        # TODO(synk): for very large odd hidden sizes this holds full W1/W2 in
        # VMEM; padding F would be needed to tile further.
        tk_cands = [f]

    n8 = _round_up(n, 8)
    tm_max = min(prefer_tm, n8)
    if num_tc >= 2 and n8 > 8 and n8 <= tm_max:
        # Split small-N workloads so every TensorCore gets at least one row tile.
        tm_max = _round_up(-(-n8 // 2), 8)
    tm_cands = sorted({max(_round_up(max(tm_max >> s, 1), 8), 8) for s in range(8)},
                      reverse=True)

    for tm in tm_cands:              # largest TM first (weight reuse)...
        for tk in tk_cands:          # ...then shrink TK to fit the budget
            if _tile_vmem_bytes(tm, tk, h) <= budget:
                return tm, tk
    return tm_cands[-1], tk_cands[-1]


def _ffn_kernel(x_ref, w1_ref, b1_ref, w2_ref, b2_ref, gamma_ref, beta_ref,
                o_ref, xbf_ref, *, eps):
    # Grid: (row tile i, FFN chunk k). x/out blocks are resident across k.
    k = pl.program_id(1)

    # Hoisted cast: x -> bf16 once per row tile, reused for every FFN chunk.
    @pl.when(k == 0)
    def _():
        xbf_ref[...] = x_ref[...].astype(jnp.bfloat16)

    # Linear1 chunk + bias + ReLU. bf16 operands, f32 accumulation on MXU.
    h = jnp.dot(xbf_ref[...], w1_ref[...], preferred_element_type=jnp.float32)
    h = jnp.maximum(h + b1_ref[...], 0.0)

    # Linear2 chunk, accumulated directly into the resident f32 output block.
    p2 = jnp.dot(h.astype(jnp.bfloat16), w2_ref[...],
                 preferred_element_type=jnp.float32)

    @pl.when(k == 0)
    def _():
        o_ref[...] = p2

    @pl.when(k != 0)
    def _():
        o_ref[...] += p2

    # Epilogue on the last FFN chunk: bias2 + residual + LayerNorm (all f32).
    @pl.when(k == pl.num_programs(1) - 1)
    def _():
        y = o_ref[...] + b2_ref[...] + x_ref[...].astype(jnp.float32)
        mean = jnp.mean(y, axis=-1, keepdims=True)
        centered = y - mean
        var = jnp.mean(centered * centered, axis=-1, keepdims=True)
        normed = centered * jax.lax.rsqrt(var + eps)
        o_ref[...] = normed * gamma_ref[...] + beta_ref[...]


def feed_forward(x, w1, b1, w2, b2, gamma, beta, *, eps=1e-8,
                 row_tile=None, ffn_tile=None):
    """x: (batch, seq, hidden). Returns same shape/dtype."""
    B, S, H = x.shape
    F = 4 * H
    assert w1.shape == (H, F) and w2.shape == (F, H)
    N = B * S

    # Per-generation VMEM budget: never the full physical capacity.
    vmem_cap, num_tc = _tpu_vmem_and_cores()
    vmem_limit = max(min(vmem_cap - (12 << 20), int(vmem_cap * 0.82)), 16 << 20)
    tile_budget = int(vmem_limit * 0.9)

    big_vmem = vmem_cap >= (96 << 20)           # v5e/v6e (128 MiB) vs v7x (64 MiB)
    if row_tile is None:
        row_tile = 1024 if big_vmem else 512
    if ffn_tile is None:
        ffn_tile = 1024 if big_vmem else 512

    TM, TK = _choose_tiles(N, H, F, tile_budget, row_tile, ffn_tile, num_tc)
    N_pad = _round_up(N, TM)

    x2 = x.reshape(N, H).astype(jnp.float32)
    if N_pad != N:
        x2 = jnp.pad(x2, ((0, N_pad - N), (0, 0)))

    # Ship matmul operands as bf16 (halves DMA + VMEM); bias/LN stay in f32.
    w1_bf = w1.astype(jnp.bfloat16)
    w2_bf = w2.astype(jnp.bfloat16)
    b1_2 = b1.reshape(1, F).astype(jnp.float32)
    b2_2 = b2.reshape(1, H).astype(jnp.float32)
    g_2 = gamma.reshape(1, H).astype(jnp.float32)
    be_2 = beta.reshape(1, H).astype(jnp.float32)

    grid = (N_pad // TM, F // TK)
    num_row_tiles = grid[0]

    flops = 4 * N_pad * H * F                    # two matmuls, 2*M*N*K each
    bytes_accessed = (
        N_pad * H * 4 * 2                                        # x in + out (f32)
        + (w1_bf.size + w2_bf.size) * 2 * num_row_tiles          # weights per row tile
        + (b1_2.size + b2_2.size + g_2.size + be_2.size) * 4 * num_row_tiles)

    out2 = pl.pallas_call(
        functools.partial(_ffn_kernel, eps=eps),
        out_shape=jax.ShapeDtypeStruct((N_pad, H), jnp.float32),
        grid_spec=pltpu.PrefetchScalarGridSpec(
            num_scalar_prefetch=0,
            grid=grid,
            in_specs=[
                pl.BlockSpec((TM, H), lambda i, k: (i, 0)),   # x tile (resident over k)
                pl.BlockSpec((H, TK), lambda i, k: (0, k)),   # w1 chunk
                pl.BlockSpec((1, TK), lambda i, k: (0, k)),   # b1 chunk
                pl.BlockSpec((TK, H), lambda i, k: (k, 0)),   # w2 chunk
                pl.BlockSpec((1, H), lambda i, k: (0, 0)),    # b2
                pl.BlockSpec((1, H), lambda i, k: (0, 0)),    # gamma
                pl.BlockSpec((1, H), lambda i, k: (0, 0)),    # beta
            ],
            out_specs=pl.BlockSpec((TM, H), lambda i, k: (i, 0)),
            scratch_shapes=[pltpu.VMEM((TM, H), jnp.bfloat16)],   # hoisted x cast
        ),
        compiler_params=pltpu.CompilerParams(
            dimension_semantics=("parallel", "arbitrary"),
            vmem_limit_bytes=int(vmem_limit),
        ),
        cost_estimate=pl.CostEstimate(
            flops=int(flops), transcendentals=int(N_pad),
            bytes_accessed=int(bytes_accessed)),
    )(x2, w1_bf, b1_2, w2_bf, b2_2, g_2, be_2)

    return out2[:N].reshape(B, S, H).astype(x.dtype)


def _reference(x, w1, b1, w2, b2, gamma, beta, eps=1e-8):
    h = jnp.maximum(x @ w1 + b1, 0.0)
    y = h @ w2 + b2 + x
    mean = jnp.mean(y, axis=-1, keepdims=True)
    var = jnp.mean((y - mean) ** 2, axis=-1, keepdims=True)
    return (y - mean) * jax.lax.rsqrt(var + eps) * gamma + beta


if __name__ == "__main__":
    key = jax.random.PRNGKey(0)
    B, S, H = 2, 8, 32   # batch=2, seq=8, hidden=32 → 4*hidden = 128

    k_x, k_w1, k_b1, k_w2, k_b2 = jax.random.split(key, 5)
    x = jax.random.normal(k_x, (B, S, H), dtype=jnp.float32)

    # Deterministic parameter init (shapes from nn.Linear / nn.LayerNorm).
    # Weights stored transposed vs. PyTorch so the kernel computes x @ w.
    lim1 = 1.0 / (H ** 0.5)
    lim2 = 1.0 / ((4 * H) ** 0.5)
    w1 = jax.random.uniform(k_w1, (H, 4 * H), jnp.float32, -lim1, lim1)
    b1 = jax.random.uniform(k_b1, (4 * H,), jnp.float32, -lim1, lim1)
    w2 = jax.random.uniform(k_w2, (4 * H, H), jnp.float32, -lim2, lim2)
    b2 = jax.random.uniform(k_b2, (H,), jnp.float32, -lim2, lim2)
    gamma = jnp.ones((H,), jnp.float32)   # LayerNorm default init
    beta = jnp.zeros((H,), jnp.float32)

    out = feed_forward(x, w1, b1, w2, b2, gamma, beta, eps=1e-8)
    out = jax.block_until_ready(out)

    ref = _reference(x, w1, b1, w2, b2, gamma, beta, eps=1e-8)
    assert out.shape == (B, S, H)
    # bf16 matmul operands (f32 accumulation) → slightly looser tolerance
    # than the pure-f32 reference.
    assert jnp.allclose(out, ref, atol=3e-2, rtol=3e-2), "mismatch vs reference"

    print("KERNEL_OK")
</pallas_src>

<mosaic_0001>
module attributes {stable_mosaic.version = 11 : i64} {
  func.func @_ffn_kernel(%arg0: i32, %arg1: i32, %arg2: memref<16x32xf32, #tpu.memory_space<vmem>>, %arg3: memref<32x128xbf16, #tpu.memory_space<vmem>>, %arg4: memref<1x128xf32, #tpu.memory_space<vmem>>, %arg5: memref<128x32xbf16, #tpu.memory_space<vmem>>, %arg6: memref<1x32xf32, #tpu.memory_space<vmem>>, %arg7: memref<1x32xf32, #tpu.memory_space<vmem>>, %arg8: memref<1x32xf32, #tpu.memory_space<vmem>>, %arg9: memref<16x32xf32, #tpu.memory_space<vmem>>, %arg10: memref<16x32xbf16, #tpu.memory_space<vmem>>) attributes {dimension_semantics = [#tpu.dimension_semantics<parallel>, #tpu.dimension_semantics<arbitrary>], iteration_bounds = array<i64: 1, 1>, scalar_prefetch = 0 : i64, scratch_operands = 1 : i64, tpu.core_type = #tpu.core_type<tc>, window_params = [{transform_indices = @transform_0, window_bounds = array<i64: 16, 32>}, {transform_indices = @transform_1, window_bounds = array<i64: 32, 128>}, {transform_indices = @transform_2, window_bounds = array<i64: 1, 128>}, {transform_indices = @transform_3, window_bounds = array<i64: 128, 32>}, {pipeline_mode = #tpu.pipeline_mode<synchronous>, transform_indices = @transform_4, window_bounds = array<i64: 1, 32>}, {pipeline_mode = #tpu.pipeline_mode<synchronous>, transform_indices = @transform_5, window_bounds = array<i64: 1, 32>}, {pipeline_mode = #tpu.pipeline_mode<synchronous>, transform_indices = @transform_6, window_bounds = array<i64: 1, 32>}, {transform_indices = @transform_7, window_bounds = array<i64: 16, 32>}]} {
    %c0_i32 = arith.constant 0 : i32
    %0 = arith.cmpi eq, %arg1, %c0_i32 : i32
    %1 = arith.extui %0 : i1 to i32
    %c0_i32_0 = arith.constant 0 : i32
    %2 = arith.cmpi ne, %1, %c0_i32_0 : i32
    scf.if %2 {
      %c0_16 = arith.constant 0 : index
      %c0_17 = arith.constant 0 : index
      %23 = vector.load %arg2[%c0_16, %c0_17] : memref<16x32xf32, #tpu.memory_space<vmem>>, vector<16x32xf32>
      %24 = arith.truncf %23 : vector<16x32xf32> to vector<16x32xbf16>
      %c0_18 = arith.constant 0 : index
      %c0_19 = arith.constant 0 : index
      %25 = vector.load %arg10[%c0_18, %c0_19] : memref<16x32xbf16, #tpu.memory_space<vmem>>, vector<16x32xbf16>
      tpu.vector_store %arg10[%c0_18, %c0_19], %24 {strides = array<i32>} : memref<16x32xbf16, #tpu.memory_space<vmem>>, vector<16x32xbf16>,
    } else {
    }
    %c0 = arith.constant 0 : index
    %c0_1 = arith.constant 0 : index
    %3 = vector.load %arg10[%c0, %c0_1] : memref<16x32xbf16, #tpu.memory_space<vmem>>, vector<16x32xbf16>
    %c0_2 = arith.constant 0 : index
    %c0_3 = arith.constant 0 : index
    %4 = vector.load %arg3[%c0_2, %c0_3] : memref<32x128xbf16, #tpu.memory_space<vmem>>, vector<32x128xbf16>
    %cst = arith.constant dense<0.000000e+00> : vector<16x128xf32>
    %5 = tpu.matmul %3, %4, %cst {dimension_numbers = #tpu.dot_dimension_numbers<[1], [0], [0], [1], [0, 0, 1, 1], [], []>} : vector<16x32xbf16>, vector<32x128xbf16>, vector<16x128xf32> -> vector<16x128xf32>
    %c0_4 = arith.constant 0 : index
    %c0_5 = arith.constant 0 : index
    %6 = vector.load %arg4[%c0_4, %c0_5] : memref<1x128xf32, #tpu.memory_space<vmem>>, vector<1x128xf32>
    %7 = vector.broadcast %6 : vector<1x128xf32> to vector<16x128xf32>
    %8 = arith.addf %5, %7 : vector<16x128xf32>
    %cst_6 = arith.constant 0.000000e+00 : f32
    %9 = vector.broadcast %cst_6 : f32 to vector<16x128xf32>
    %10 = arith.maximumf %8, %9 : vector<16x128xf32>
    %11 = arith.truncf %10 : vector<16x128xf32> to vector<16x128xbf16>
    %c0_7 = arith.constant 0 : index
    %c0_8 = arith.constant 0 : index
    %12 = vector.load %arg5[%c0_7, %c0_8] : memref<128x32xbf16, #tpu.memory_space<vmem>>, vector<128x32xbf16>
    %cst_9 = arith.constant dense<0.000000e+00> : vector<16x32xf32>
    %13 = tpu.matmul %11, %12, %cst_9 {dimension_numbers = #tpu.dot_dimension_numbers<[1], [0], [0], [1], [0, 0, 1, 1], [], []>} : vector<16x128xbf16>, vector<128x32xbf16>, vector<16x32xf32> -> vector<16x32xf32>
    %c0_i32_10 = arith.constant 0 : i32
    %14 = arith.cmpi eq, %arg1, %c0_i32_10 : i32
    %15 = arith.extui %14 : i1 to i32
    %c0_i32_11 = arith.constant 0 : i32
    %16 = arith.cmpi ne, %15, %c0_i32_11 : i32
    scf.if %16 {
      %c0_16 = arith.constant 0 : index
      %c0_17 = arith.constant 0 : index
      %23 = vector.load %arg9[%c0_16, %c0_17] : memref<16x32xf32, #tpu.memory_space<vmem>>, vector<16x32xf32>
      tpu.vector_store %arg9[%c0_16, %c0_17], %13 {strides = array<i32>} : memref<16x32xf32, #tpu.memory_space<vmem>>, vector<16x32xf32>,
    } else {
    }
    %c0_i32_12 = arith.constant 0 : i32
    %17 = arith.cmpi ne, %arg1, %c0_i32_12 : i32
    %18 = arith.extui %17 : i1 to i32
    %c0_i32_13 = arith.constant 0 : i32
    %19 = arith.cmpi ne, %18, %c0_i32_13 : i32
    scf.if %19 {
      %c0_16 = arith.constant 0 : index
      %c0_17 = arith.constant 0 : index
      %23 = vector.load %arg9[%c0_16, %c0_17] : memref<16x32xf32, #tpu.memory_space<vmem>>, vector<16x32xf32>
      %24 = arith.addf %23, %13 : vector<16x32xf32>
      %c0_18 = arith.constant 0 : index
      %c0_19 = arith.constant 0 : index
      %25 = vector.load %arg9[%c0_18, %c0_19] : memref<16x32xf32, #tpu.memory_space<vmem>>, vector<16x32xf32>
      tpu.vector_store %arg9[%c0_18, %c0_19], %24 {strides = array<i32>} : memref<16x32xf32, #tpu.memory_space<vmem>>, vector<16x32xf32>,
    } else {
    }
    %c0_i32_14 = arith.constant 0 : i32
    %20 = arith.cmpi eq, %arg1, %c0_i32_14 : i32
    %21 = arith.extui %20 : i1 to i32
    %c0_i32_15 = arith.constant 0 : i32
    %22 = arith.cmpi ne, %21, %c0_i32_15 : i32
    scf.if %22 {
      %c0_16 = arith.constant 0 : index
      %c0_17 = arith.constant 0 : index
      %23 = vector.load %arg9[%c0_16, %c0_17] : memref<16x32xf32, #tpu.memory_space<vmem>>, vector<16x32xf32>
      %c0_18 = arith.constant 0 : index
      %c0_19 = arith.constant 0 : index
      %24 = vector.load %arg6[%c0_18, %c0_19] : memref<1x32xf32, #tpu.memory_space<vmem>>, vector<1x32xf32>
      %25 = vector.broadcast %24 : vector<1x32xf32> to vector<16x32xf32>
      %26 = arith.addf %23, %25 : vector<16x32xf32>
      %c0_20 = arith.constant 0 : index
      %c0_21 = arith.constant 0 : index
      %27 = vector.load %arg2[%c0_20, %c0_21] : memref<16x32xf32, #tpu.memory_space<vmem>>, vector<16x32xf32>
      %28 = arith.addf %26, %27 : vector<16x32xf32>
      %cst_22 = arith.constant dense<0.000000e+00> : vector<16xf32>
      %29 = vector.multi_reduction <add>, %28, %cst_22 [1] : vector<16x32xf32> to vector<16xf32>
      %30 = vector.shape_cast %29 : vector<16xf32> to vector<16x1xf32>
      %cst_23 = arith.constant 3.200000e+01 : f32
      %31 = vector.broadcast %cst_23 : f32 to vector<16x1xf32>
      %32 = arith.divf %30, %31 : vector<16x1xf32>
      %33 = vector.broadcast %32 : vector<16x1xf32> to vector<16x32xf32>
      %34 = arith.subf %28, %33 : vector<16x32xf32>
      %35 = arith.mulf %34, %34 : vector<16x32xf32>
      %cst_24 = arith.constant dense<0.000000e+00> : vector<16xf32>
      %36 = vector.multi_reduction <add>, %35, %cst_24 [1] : vector<16x32xf32> to vector<16xf32>
      %37 = vector.shape_cast %36 : vector<16xf32> to vector<16x1xf32>
      %cst_25 = arith.constant 3.200000e+01 : f32
      %38 = vector.broadcast %cst_25 : f32 to vector<16x1xf32>
      %39 = arith.divf %37, %38 : vector<16x1xf32>
      %cst_26 = arith.constant 9.99999993E-9 : f32
      %40 = vector.broadcast %cst_26 : f32 to vector<16x1xf32>
      %41 = arith.addf %39, %40 : vector<16x1xf32>
      %42 = math.rsqrt %41 : vector<16x1xf32>
      %43 = vector.broadcast %42 : vector<16x1xf32> to vector<16x32xf32>
      %44 = arith.mulf %34, %43 : vector<16x32xf32>
      %c0_27 = arith.constant 0 : index
      %c0_28 = arith.constant 0 : index
      %45 = vector.load %arg7[%c0_27, %c0_28] : memref<1x32xf32, #tpu.memory_space<vmem>>, vector<1x32xf32>
      %46 = vector.broadcast %45 : vector<1x32xf32> to vector<16x32xf32>
      %47 = arith.mulf %44, %46 : vector<16x32xf32>
      %c0_29 = arith.constant 0 : index
      %c0_30 = arith.constant 0 : index
      %48 = vector.load %arg8[%c0_29, %c0_30] : memref<1x32xf32, #tpu.memory_space<vmem>>, vector<1x32xf32>
      %49 = vector.broadcast %48 : vector<1x32xf32> to vector<16x32xf32>
      %50 = arith.addf %47, %49 : vector<16x32xf32>
      %c0_31 = arith.constant 0 : index
      %c0_32 = arith.constant 0 : index
      %51 = vector.load %arg9[%c0_31, %c0_32] : memref<16x32xf32, #tpu.memory_space<vmem>>, vector<16x32xf32>
      tpu.vector_store %arg9[%c0_31, %c0_32], %50 {strides = array<i32>} : memref<16x32xf32, #tpu.memory_space<vmem>>, vector<16x32xf32>,
    } else {
    }
    return
  }
  func.func @transform_0(%arg0: i32, %arg1: i32) -> (i32, i32) {
    %c0_i32 = arith.constant 0 : i32
    %c0_i32_0 = arith.constant 0 : i32
    return %arg0, %c0_i32 : i32, i32
  }
  func.func @transform_1(%arg0: i32, %arg1: i32) -> (i32, i32) {
    %c0_i32 = arith.constant 0 : i32
    %c0_i32_0 = arith.constant 0 : i32
    return %c0_i32, %arg1 : i32, i32
  }
  func.func @transform_2(%arg0: i32, %arg1: i32) -> (i32, i32) {
    %c0_i32 = arith.constant 0 : i32
    %c0_i32_0 = arith.constant 0 : i32
    return %c0_i32, %arg1 : i32, i32
  }
  func.func @transform_3(%arg0: i32, %arg1: i32) -> (i32, i32) {
    %c0_i32 = arith.constant 0 : i32
    %c0_i32_0 = arith.constant 0 : i32
    return %arg1, %c0_i32 : i32, i32
  }
  func.func @transform_4(%arg0: i32, %arg1: i32) -> (i32, i32) {
    %c0_i32 = arith.constant 0 : i32
    %c0_i32_0 = arith.constant 0 : i32
    %c0_i32_1 = arith.constant 0 : i32
    return %c0_i32, %c0_i32_0 : i32, i32
  }
  func.func @transform_5(%arg0: i32, %arg1: i32) -> (i32, i32) {
    %c0_i32 = arith.constant 0 : i32
    %c0_i32_0 = arith.constant 0 : i32
    %c0_i32_1 = arith.constant 0 : i32
    return %c0_i32, %c0_i32_0 : i32, i32
  }
  func.func @transform_6(%arg0: i32, %arg1: i32) -> (i32, i32) {
    %c0_i32 = arith.constant 0 : i32
    %c0_i32_0 = arith.constant 0 : i32
    %c0_i32_1 = arith.constant 0 : i32
    return %c0_i32, %c0_i32_0 : i32, i32
  }
  func.func @transform_7(%arg0: i32, %arg1: i32) -> (i32, i32) {
    %c0_i32 = arith.constant 0 : i32
    %c0_i32_0 = arith.constant 0 : i32
    return %arg0, %c0_i32 : i32, i32
  }
}

</mosaic_0001>

<llo_original>
// kernel: tpu_custom_call.1
$region0: #{tpu_custom_call.1}
  #allocation0 [shape = 'u32[]', space=smem, size = 0x4, offset = 0x4, fixed_abs, tag = 'smem constant byte address 0x4 - core index']
  #allocation1 [shape = 'u32[144,128]{1,0:T(1,128)}', space=vmem, size = 0x12000, scoped, tag = 'internal scratch']
  #allocation2 [shape = 'bf16[16,32]{1,0:T(16,128)(2,1)}', space=vmem, size = 0x1000, scoped, tag = 'scratch operand']
  %s0 = inlined_call_operand.vmem [shape: f32[16,32], index: 0, kind: input, shape index: {}]
  %s1 = inlined_call_operand.vmem [shape: bf16[32,128], index: 1, kind: input, shape index: {}]
  %s2 = inlined_call_operand.vmem [shape: f32[1,128], index: 2, kind: input, shape index: {}]
  %s3 = inlined_call_operand.vmem [shape: bf16[128,32], index: 3, kind: input, shape index: {}]
  %s4 = inlined_call_operand.vmem [shape: f32[1,32], index: 4, kind: input, shape index: {}]
  %s5 = inlined_call_operand.vmem [shape: f32[1,32], index: 5, kind: input, shape index: {}]
  %s6 = inlined_call_operand.vmem [shape: f32[1,32], index: 6, kind: input, shape index: {}]
  %s7 = inlined_call_operand.hbm [shape: f32[16,32], index: 7, kind: output, shape index: {}]
  %s8 = sld [smem:[#allocation0]]
  $region54: #{tpu_custom_call.1} parent=0
    _
  %s10 = ssub.s32 1, %s8
  %s11 = scalar_select 0, %s10, %s8
  $region1: #{tpu_custom_call.1} parent=0
    #allocation3 [shape = 'u8[8192]{0}', space=vmem, size = 0x2000, scoped, tag = 'output window, operand 0, single buffered']
    #allocation4 [shape = 's32[1]{0}', space=sflag, size = 0x4, scoped, tag = 'scoped memory for tpu_custom_call.1']
    %12 = vsyncpa [#allocation4], 0
    // Predicated region
    $region2: #{tpu_custom_call.1} parent=1 // pred_check
      _
    $region3: #{tpu_custom_call.1} parent=1 // pred_check_branch
      %14 = sbr.rel (0) target = $region5
    $region4: #{tpu_custom_call.1} parent=1 // pred_region
      _
    $region5: #{tpu_custom_call.1} parent=1 // pred_fallthru
      _
    // Predicated region
    $region6: #{tpu_custom_call.1} parent=1 // pred_check
      _
    $region7: #{tpu_custom_call.1} parent=1 // pred_check_branch
      %16 = sbr.rel (0) target = $region9
    $region8: #{tpu_custom_call.1} parent=1 // pred_region
      _
    $region9: #{tpu_custom_call.1} parent=1 // pred_fallthru
      _
    // Predicated region
    $region10: #{tpu_custom_call.1} parent=1 // pred_check
      _
    $region11: #{tpu_custom_call.1} parent=1 // pred_check_branch
      %18 = sbr.rel (0) target = $region13
    $region12: #{tpu_custom_call.1} parent=1 // pred_region
      _
    $region13: #{tpu_custom_call.1} parent=1 // pred_fallthru
      _
    // Predicated region
    $region14: #{tpu_custom_call.1} parent=1 // pred_check
      _
    $region15: #{tpu_custom_call.1} parent=1 // pred_check_branch
      %20 = sbr.rel (0) target = $region17
    $region16: #{tpu_custom_call.1} parent=1 // pred_region
      _
    $region17: #{tpu_custom_call.1} parent=1 // pred_fallthru
      _
    // Predicated region
    $region18: #{tpu_custom_call.1} parent=1 // pred_check
      _
    $region19: #{tpu_custom_call.1} parent=1 // pred_check_branch
      %22 = sbr.rel (0) target = $region21
    $region20: #{tpu_custom_call.1} parent=1 // pred_region
      _
    $region21: #{tpu_custom_call.1} parent=1 // pred_fallthru
      _
    // Predicated region
    $region22: #{tpu_custom_call.1} parent=1 // pred_check
      _
    $region23: #{tpu_custom_call.1} parent=1 // pred_check_branch
      %24 = sbr.rel (0) target = $region25
    $region24: #{tpu_custom_call.1} parent=1 // pred_region
      _
    $region25: #{tpu_custom_call.1} parent=1 // pred_fallthru
      _
    // Predicated region
    $region26: #{tpu_custom_call.1} parent=1 // pred_check
      _
    $region27: #{tpu_custom_call.1} parent=1 // pred_check_branch
      %26 = sbr.rel (0) target = $region29
    $region28: #{tpu_custom_call.1} parent=1 // pred_region
      _
    $region29: #{tpu_custom_call.1} parent=1 // pred_fallthru
      _
    %p28 = scmp.eq.s32.totalorder 0, 0
    // Predicated region
    $region30: #{tpu_custom_call.1} parent=1 // pred_check
      %p29 = pneg %p28
    $region31: #{tpu_custom_call.1} parent=1 // pred_check_branch
      %31 = sbr.rel (%p29) target = $region33
    $region32: #{tpu_custom_call.1} parent=1 // pred_region
      %v32 = vld [vmem:[%s0] sm:$0xff]
      %v33 = vld [vmem:[%s0 + $0x8] sm:$0xff]
      %v34 = vpack.c.bf16 %v33, %v32
      %vm35 = vcmask 261120
      %36 = vst.msk [vmem:[#allocation2] sm:$0xff] %vm35, %v34
    $region33: #{tpu_custom_call.1} parent=1 // pred_fallthru
      _
    %v37 = vld [vmem:[#allocation2] sm:$0xff]
    %v38 = vld [vmem:[%s1] sm:$0xf]
    %v39 = vld [vmem:[%s1 + $0x4] sm:$0xf]
    %v40 = vld [vmem:[%s1 + $0x8] sm:$0xf]
    %v41 = vld [vmem:[%s1 + $0xc] sm:$0xf]
    %v42 = vld [vmem:[%s2] sm:$0x1]
    %v44 = vlaneseq
    %v45 = vshrl.u32 %v44, 7
    %v46 = vsub.s32 0, %v45
    %v47 = vrot.slane %v42, %v46
    %v53 = vunpack.c.l.b16 %v38
    %v54 = vunpack.c.l.b16 %v39
    %v55 = vunpack.c.l.b16 %v40
    %v56 = vunpack.c.l.b16 %v41
    %v57 = vpack.c.b16 %v54, %v53
    %v58 = vpack.c.b16 %v56, %v55
    %vm61 = vcmask 261120
    %v63 = vsel %vm61, %v37, 0
    %65 = vmatprep.subr.bf16.mxu0 0
    %66 = vmatpush1.bf16.msra.mxu0 %v57
    %67 = vmatprep.subr.bf16.mxu0 0
    %68 = vmatpush1.bf16.msra.mxu0 %v58
    %69 = vmatprep.subr.bf16.mxu0 0
    %70 = vmatpush1.bf16.msra.mxu0 0
    %71 = vmatprep.subr.bf16.mxu0 0
    %72 = vmatpush1.bf16.msra.mxu0 0
    %73 = vmatprep.subr.bf16.mxu0 0
    %74 = vmatpush1.bf16.msra.mxu0 0
    %75 = vmatprep.subr.bf16.mxu0 0
    %76 = vmatpush1.bf16.msra.mxu0 0
    %77 = vmatprep.subr.bf16.mxu0 0
    %78 = vmatpush1.bf16.msra.mxu0 0
    %79 = vmatprep.subr.bf16.mxu0 0
    %80 = vmatpush1.bf16.msra.mxu0 0
    %81 = vmatprep.subr.bf16.mxu0 0
    %82 = vmatpush1.bf16.msra.mxu0 0
    %83 = vmatprep.subr.bf16.mxu0 0
    %84 = vmatpush1.bf16.msra.mxu0 0
    %85 = vmatprep.subr.bf16.mxu0 0
    %86 = vmatpush1.bf16.msra.mxu0 0
    %87 = vmatprep.subr.bf16.mxu0 0
    %88 = vmatpush1.bf16.msra.mxu0 0
    %89 = vmatprep.subr.bf16.mxu0 0
    %90 = vmatpush1.bf16.msra.mxu0 0
    %91 = vmatprep.subr.bf16.mxu0 0
    %92 = vmatpush1.bf16.msra.mxu0 0
    %93 = vmatprep.subr.bf16.mxu0 0
    %94 = vmatpush1.bf16.msra.mxu0 0
    %95 = vmatprep.subr.bf16.mxu0 0
    %96 = vmatpush1.bf16.msra.mxu0 0
    %97 = vmatprep.mubr.bf16.mxu0 0
    %98 = vmatmul.mubr.bf16.gmra.mrb[0].mxu0 %v63
    %v99 = vpop.f32.mrb[0].mxu0
    %v100 = vadd.f32 %v47, %v99
    %v101 = vpop.f32.mrb[0].mxu0
    %v102 = vpop.f32.mrb[0].mxu0
    %v103 = vadd.f32 %v47, %v102
    %v104 = vpop.f32.mrb[0].mxu0
    %105 = vdwg.mxu0
    %v106 = vmax.f32 %v100, 0.0
    %v107 = vmax.f32 %v103, 0.0
    %v108 = vpack.c.bf16 %v107, %v106
    %v109 = vld [vmem:[%s3] sm:$0xf]
    %v110 = vld [vmem:[%s3 + $0x4] sm:$0xf]
    %v111 = vld [vmem:[%s3 + $0x8] sm:$0xf]
    %v112 = vld [vmem:[%s3 + $0xc] sm:$0xf]
    %v113 = vld [vmem:[%s3 + $0x10] sm:$0xf]
    %v114 = vld [vmem:[%s3 + $0x14] sm:$0xf]
    %v115 = vld [vmem:[%s3 + $0x18] sm:$0xf]
    %v116 = vld [vmem:[%s3 + $0x1c] sm:$0xf]
    %v117 = vld [vmem:[%s3 + $0x20] sm:$0xf]
    %v118 = vld [vmem:[%s3 + $0x24] sm:$0xf]
    %v119 = vld [vmem:[%s3 + $0x28] sm:$0xf]
    %v120 = vld [vmem:[%s3 + $0x2c] sm:$0xf]
    %v121 = vld [vmem:[%s3 + $0x30] sm:$0xf]
    %v122 = vld [vmem:[%s3 + $0x34] sm:$0xf]
    %v123 = vld [vmem:[%s3 + $0x38] sm:$0xf]
    %v124 = vld [vmem:[%s3 + $0x3c] sm:$0xf]
    %v141 = vunpack.c.l.b16 %v109
    %v142 = vunpack.c.l.b16 %v110
    %v143 = vunpack.c.l.b16 %v111
    %v144 = vunpack.c.l.b16 %v112
    %v145 = vunpack.c.l.b16 %v113
    %v146 = vunpack.c.l.b16 %v114
    %v147 = vunpack.c.l.b16 %v115
    %v148 = vunpack.c.l.b16 %v116
    %v149 = vunpack.c.l.b16 %v117
    %v150 = vunpack.c.l.b16 %v118
    %v151 = vunpack.c.l.b16 %v119
    %v152 = vunpack.c.l.b16 %v120
    %v153 = vunpack.c.l.b16 %v121
    %v154 = vunpack.c.l.b16 %v122
    %v155 = vunpack.c.l.b16 %v123
    %v156 = vunpack.c.l.b16 %v124
    %v157 = vpack.c.b16 %v142, %v141
    %v158 = vpack.c.b16 %v144, %v143
    %v159 = vpack.c.b16 %v146, %v145
    %v160 = vpack.c.b16 %v148, %v147
    %v161 = vpack.c.b16 %v150, %v149
    %v162 = vpack.c.b16 %v152, %v151
    %v163 = vpack.c.b16 %v154, %v153
    %v164 = vpack.c.b16 %v156, %v155
    %173 = vmatprep.subr.bf16.mxu0 0
    %174 = vmatpush1.bf16.msra.mxu0 %v157
    %175 = vmatprep.subr.bf16.mxu0 0
    %176 = vmatpush1.bf16.msra.mxu0 %v158
    %177 = vmatprep.subr.bf16.mxu0 0
    %178 = vmatpush1.bf16.msra.mxu0 %v159
    %179 = vmatprep.subr.bf16.mxu0 0
    %180 = vmatpush1.bf16.msra.mxu0 %v160
    %181 = vmatprep.subr.bf16.mxu0 0
    %182 = vmatpush1.bf16.msra.mxu0 %v161
    %183 = vmatprep.subr.bf16.mxu0 0
    %184 = vmatpush1.bf16.msra.mxu0 %v162
    %185 = vmatprep.subr.bf16.mxu0 0
    %186 = vmatpush1.bf16.msra.mxu0 %v163
    %187 = vmatprep.subr.bf16.mxu0 0
    %188 = vmatpush1.bf16.msra.mxu0 %v164
    %189 = vmatprep.subr.bf16.mxu0 0
    %190 = vmatpush1.bf16.msra.mxu0 0
    %191 = vmatprep.subr.bf16.mxu0 0
    %192 = vmatpush1.bf16.msra.mxu0 0
    %193 = vmatprep.subr.bf16.mxu0 0
    %194 = vmatpush1.bf16.msra.mxu0 0
    %195 = vmatprep.subr.bf16.mxu0 0
    %196 = vmatpush1.bf16.msra.mxu0 0
    %197 = vmatprep.subr.bf16.mxu0 0
    %198 = vmatpush1.bf16.msra.mxu0 0
    %199 = vmatprep.subr.bf16.mxu0 0
    %200 = vmatpush1.bf16.msra.mxu0 0
    %201 = vmatprep.subr.bf16.mxu0 0
    %202 = vmatpush1.bf16.msra.mxu0 0
    %203 = vmatprep.subr.bf16.mxu0 0
    %204 = vmatpush1.bf16.msra.mxu0 0
    %205 = vmatprep.mubr.bf16.mxu0 0
    %206 = vmatmul.mubr.bf16.gmra.mrb[0].mxu0 %v108
    %v207 = vpop.f32.mrb[0].mxu0
    %v208 = vadd.f32 0.0, %v207
    %v209 = vpop.f32.mrb[0].mxu0
    %v210 = vpop.f32.mrb[0].mxu0
    %v211 = vadd.f32 0.0, %v210
    %v212 = vpop.f32.mrb[0].mxu0
    %213 = vdwg.mxu0
    // Predicated region
    $region34: #{tpu_custom_call.1} parent=1 // pred_check
      %p214 = pneg %p28
    $region35: #{tpu_custom_call.1} parent=1 // pred_check_branch
      %216 = sbr.rel (%p214) target = $region37
    $region36: #{tpu_custom_call.1} parent=1 // pred_region
      %217 = vst.msk [vmem:[#allocation3] sm:$0xff] %vm61, %v208
      %218 = vst.msk [vmem:[#allocation3 + $0x8] sm:$0xff] %vm61, %v211
    $region37: #{tpu_custom_call.1} parent=1 // pred_fallthru
      _
    %p219 = scmp.ne.s32.totalorder 0, 0
    // Predicated region
    $region38: #{tpu_custom_call.1} parent=1 // pred_check
      %p220 = pneg %p219
    $region39: #{tpu_custom_call.1} parent=1 // pred_check_branch
      %222 = sbr.rel (%p220) target = $region41
    $region40: #{tpu_custom_call.1} parent=1 // pred_region
      %v223 = vld [vmem:[#allocation3] sm:$0xff]
      %v224 = vld [vmem:[#allocation3 + $0x8] sm:$0xff]
      %v225 = vadd.f32 %v223, %v208
      %v226 = vadd.f32 %v224, %v211
      %227 = vst.msk [vmem:[#allocation3] sm:$0xff] %vm61, %v225
      %228 = vst.msk [vmem:[#allocation3 + $0x8] sm:$0xff] %vm61, %v226
    $region41: #{tpu_custom_call.1} parent=1 // pred_fallthru
      _
    // Predicated region
    $region42: #{tpu_custom_call.1} parent=1 // pred_check
      %p229 = pneg %p28
    $region43: #{tpu_custom_call.1} parent=1 // pred_check_branch
      %231 = sbr.rel (%p229) target = $region45
    $region44: #{tpu_custom_call.1} parent=1 // pred_region
      %v232 = vld [vmem:[#allocation3] sm:$0xff]
      %v233 = vld [vmem:[#allocation3 + $0x8] sm:$0xff]
      %v234 = vld [vmem:[%s4] sm:$0x1]
      %v236 = vlaneseq
      %v237 = vshrl.u32 %v236, 7
      %v238 = vsub.s32 0, %v237
      %v239 = vrot.slane %v234, %v238
      %v241 = vadd.f32 %v232, %v239
      %v242 = vadd.f32 %v233, %v239
      %v243 = vld [vmem:[%s0] sm:$0xff]
      %v244 = vld [vmem:[%s0 + $0x8] sm:$0xff]
      %v245 = vadd.f32 %v241, %v243
      %v246 = vadd.f32 %v242, %v244
      %v247 = vsel %vm61, %v245, 0.0
      %248 = vadd.xlane.f32.xlu0 %v247
      %v249 = vpop.xlane.xlu0 %248
      %v250 = vsel %vm61, %v246, 0.0
      %251 = vadd.xlane.f32.xlu0 %v250
      %v252 = vpop.xlane.xlu0 %251
      %v253 = vrcp.pop 32.0
      %v254 = vmul.f32 %v249, %v253
      %v255 = vmul.f32 %v252, %v253
      %v256 = vsub.f32 %v245, %v254
      %v257 = vsub.f32 %v246, %v255
      %v258 = vmul.f32 %v256, %v256
      %v259 = vmul.f32 %v257, %v257
      %v260 = vsel %vm61, %v258, 0.0
      %261 = vadd.xlane.f32.xlu0 %v260
      %v262 = vpop.xlane.xlu0 %261
      %v263 = vsel %vm61, %v259, 0.0
      %264 = vadd.xlane.f32.xlu0 %v263
      %v265 = vpop.xlane.xlu0 %264
      %v266 = vmul.f32 %v262, %v253
      %v267 = vmul.f32 %v265, %v253
      %v268 = vadd.f32 %v266, 1e-08
      %v269 = vadd.f32 %v267, 1e-08
      %v270 = vrsqrt.pop %v268
      %v271 = vrsqrt.pop %v269
      %v272 = vmul.f32 %v256, %v270
      %v273 = vmul.f32 %v257, %v271
      %v274 = vld [vmem:[%s5] sm:$0x1]
      %v276 = vlaneseq
      %v277 = vshrl.u32 %v276, 7
      %v278 = vsub.s32 0, %v277
      %v279 = vrot.slane %v274, %v278
      %v281 = vmul.f32 %v272, %v279
      %v282 = vmul.f32 %v273, %v279
      %v283 = vld [vmem:[%s6] sm:$0x1]
      %v285 = vlaneseq
      %v286 = vshrl.u32 %v285, 7
      %v287 = vsub.s32 0, %v286
      %v288 = vrot.slane %v283, %v287
      %v290 = vadd.f32 %v281, %v288
      %v291 = vadd.f32 %v282, %v288
      %292 = vst.msk [vmem:[#allocation3] sm:$0xff] %vm61, %v290
      %293 = vst.msk [vmem:[#allocation3 + $0x8] sm:$0xff] %vm61, %v291
    $region45: #{tpu_custom_call.1} parent=1 // pred_fallthru
      _
    // Predicated region
    $region46: #{tpu_custom_call.1} parent=1 // pred_check
      _
    $region47: #{tpu_custom_call.1} parent=1 // pred_check_branch
      %295 = sbr.rel (0) target = $region49
    $region48: #{tpu_custom_call.1} parent=1 // pred_region
      %s297 = ssub.s32 256, 256
      %298 = vsyncadd [#allocation4], %s297
      %s299 = sshll.u32 [#allocation3], 4
      %s300 = int_to_ptr.vmem [resolvable:$true] %s299
      %305 = dma.vmem_to_hbm [thread:$0]  %s300, 256, %s7, [#allocation4], 128, 128, 8
    $region49: #{tpu_custom_call.1} parent=1 // pred_fallthru
      _
    // Predicated region
    $region50: #{tpu_custom_call.1} parent=1 // pred_check
      _
    $region51: #{tpu_custom_call.1} parent=1 // pred_check_branch
      %307 = sbr.rel (0) target = $region53
    $region52: #{tpu_custom_call.1} parent=1 // pred_region
      %308 = dma.done [#allocation4], 256
    $region53: #{tpu_custom_call.1} parent=1 // pred_fallthru
      _
    %309 = vsyncpa [#allocation4], 1

</llo_original>
